<compile_context>
chip_gen: v7x
topology: tpu7x:2x2x1
jax: 0.10.0
libtpu: 0.0.40
codegen_flags: <defaults>
</compile_context>

<pallas_src>
import functools
import math

import jax
import jax.numpy as jnp
from jax.experimental import pallas as pl
from jax.experimental.pallas import tpu as pltpu


def _reward_mlp_kernel(x_ref, w1_ref, b1_ref, w2_ref, b2_ref, w3_ref, b3_ref,
                       o_ref):
    # Layer 1: single fused (tb, S+A) @ (S+A, 128) MXU matmul (operands already
    # in the MXU dtype), f32 accumulation; bias + ReLU in f32 on the VPU.
    h1 = jnp.dot(x_ref[...], w1_ref[...],
                 preferred_element_type=jnp.float32) + b1_ref[...]
    h1 = jnp.maximum(h1, 0.0)

    # Layer 2: (tb, 128) @ (128, 64); explicit cast of h1 to the MXU operand
    # dtype (bf16 by default -> deterministic single-pass), f32 accumulation.
    h2 = jnp.dot(h1.astype(w2_ref.dtype), w2_ref[...],
                 preferred_element_type=jnp.float32) + b2_ref[...]
    h2 = jnp.maximum(h2, 0.0)

    # Layer 3 (64 -> 1): an N=1 MXU matmul wastes nearly all output columns, so
    # do a VPU multiply + lane reduction (those slots have slack) in f32.
    out = jnp.sum(h2 * w3_ref[...], axis=-1, keepdims=True) + b3_ref[...]

    # (tb, 1) store is lane-masked but output bytes are negligible here.
    o_ref[...] = out.astype(o_ref.dtype)


@functools.partial(jax.jit, static_argnames=("mxu_dtype", "block_batch"))
def reward_network_forward(state, action, params, *,
                           mxu_dtype=jnp.bfloat16, block_batch=2048):
    """Pallas equivalent of RewardNetwork.forward(state, action)."""
    if action.ndim == 1:
        action = action[:, None]

    B, state_dim = state.shape
    action_dim = action.shape[1]
    in_dim = state_dim + action_dim

    w1, b1 = params["w1"], params["b1"]
    w2, b2 = params["w2"], params["b2"]
    w3, b3 = params["w3"], params["b3"]
    h1_dim = w1.shape[1]
    h2_dim = w2.shape[1]

    # Single packed x = [state | action], written directly in the MXU operand
    # dtype: one fused concat+cast pass over x in the wrapper (cheap -- the
    # kernel is MXU-bound), one input tensor to DMA, and bf16 halves its bytes.
    x = jnp.concatenate([state, action], axis=-1).astype(mxu_dtype)

    w1_c = w1.astype(mxu_dtype)                       # (S+A, 128), one fused block
    w2_c = w2.astype(mxu_dtype)                       # (128, 64)
    w3_row = w3.reshape(1, h2_dim).astype(jnp.float32)  # (1, 64) for VPU reduce
    b1 = b1.reshape(1, h1_dim).astype(jnp.float32)
    b2 = b2.reshape(1, h2_dim).astype(jnp.float32)
    b3 = b3.reshape(1, 1).astype(jnp.float32)

    # Batch tile: big enough to amortize per-grid-step overhead, but for larger
    # batches capped so the grid has >= 4 steps (megacore sharding on v7x's two
    # TensorCores + double-buffered x/out DMAs).  Full-dim single block for
    # tiny batches; otherwise sublane-aligned.
    tb = min(B, block_batch)
    if B > 512:
        tb = min(tb, -(-B // 4))            # >= 4 grid steps
    if tb < B:
        tb = max(8, ((tb + 7) // 8) * 8)    # sublane-aligned tile
    grid = (pl.cdiv(B, tb),)

    x_itemsize = jnp.dtype(mxu_dtype).itemsize
    cost = pl.CostEstimate(
        flops=2 * B * (in_dim * h1_dim + h1_dim * h2_dim + h2_dim),
        transcendentals=0,
        bytes_accessed=(B * in_dim * x_itemsize                  # x reads
                        + B * 4                                  # out writes
                        + (w1.size + w2.size) * x_itemsize       # MXU weights
                        + (b1.size + b2.size + w3.size + b3.size) * 4),
    )

    pinned = lambda shape: pl.BlockSpec(shape, lambda i: (0, 0))  # VMEM-resident

    out = pl.pallas_call(
        _reward_mlp_kernel,
        out_shape=jax.ShapeDtypeStruct((B, 1), jnp.float32),
        grid=grid,
        in_specs=[
            pl.BlockSpec((tb, in_dim), lambda i: (i, 0)),   # packed x (tb, S+A)
            pinned((in_dim, h1_dim)),                       # w1 (fused)
            pinned((1, h1_dim)),                            # b1
            pinned((h1_dim, h2_dim)),                       # w2
            pinned((1, h2_dim)),                            # b2
            pinned((1, h2_dim)),                            # w3 row
            pinned((1, 1)),                                 # b3
        ],
        out_specs=pl.BlockSpec((tb, 1), lambda i: (i, 0)),
        compiler_params=pltpu.CompilerParams(
            dimension_semantics=("parallel",),       # megacore sharding on v7x
            vmem_limit_bytes=32 * 1024 * 1024,       # tb<=2048 leaves big headroom
        ),
        cost_estimate=cost,
    )(x, w1_c, b1, w2_c, b2, w3_row, b3)
    return out


def init_params(key, state_dim, action_dim):
    """Deterministic init mirroring nn.Linear's default U(-1/sqrt(fan_in), .)."""
    dims = [(state_dim + action_dim, 128), (128, 64), (64, 1)]
    params = {}
    for idx, (fan_in, fan_out) in enumerate(dims, start=1):
        key, kw, kb = jax.random.split(key, 3)
        bound = 1.0 / math.sqrt(fan_in)
        params[f"w{idx}"] = jax.random.uniform(
            kw, (fan_in, fan_out), jnp.float32, minval=-bound, maxval=bound)
        params[f"b{idx}"] = jax.random.uniform(
            kb, (1, fan_out), jnp.float32, minval=-bound, maxval=bound)
    return params


def _reference_forward(state, action, params):
    # Pure-JAX reference for correctness checks.
    if action.ndim == 1:
        action = action[:, None]
    x = jnp.concatenate([state, action], axis=-1).astype(jnp.float32)
    h1 = jnp.maximum(x @ params["w1"] + params["b1"], 0.0)
    h2 = jnp.maximum(h1 @ params["w2"] + params["b2"], 0.0)
    return h2 @ params["w3"] + params["b3"]


if __name__ == "__main__":
    state_dim, action_dim = 8, 4

    key = jax.random.PRNGKey(0)
    key, ks, ka, kp = jax.random.split(key, 4)
    params = init_params(kp, state_dim, action_dim)

    # Small single-tile case (typical RewardNetwork usage), default bf16 MXU
    # operands with f32 accumulation -> loose tolerance vs the f32 reference.
    batch = 8
    state = jax.random.normal(ks, (batch, state_dim), jnp.float32)
    action = jax.random.normal(ka, (batch, action_dim), jnp.float32)

    out = jax.block_until_ready(reward_network_forward(state, action, params))
    ref = _reference_forward(state, action, params)
    assert out.shape == (batch, 1), out.shape
    scale = jnp.max(jnp.abs(ref))
    err = jnp.max(jnp.abs(out - ref))
    assert err <= 0.05 * scale + 5e-3, (float(err), float(scale))

    # Multi-tile grid with a partial last block: 20 rows, tile of 8 -> grid=(3,).
    batch2 = 20
    key, ks2, ka2 = jax.random.split(key, 3)
    state2 = jax.random.normal(ks2, (batch2, state_dim), jnp.float32)
    action2 = jax.random.normal(ka2, (batch2, action_dim), jnp.float32)
    out2 = jax.block_until_ready(
        reward_network_forward(state2, action2, params, block_batch=8))
    ref2 = _reference_forward(state2, action2, params)
    assert out2.shape == (batch2, 1), out2.shape
    scale2 = jnp.max(jnp.abs(ref2))
    err2 = jnp.max(jnp.abs(out2 - ref2))
    assert err2 <= 0.05 * scale2 + 5e-3, (float(err2), float(scale2))

    # f32 operand path (debug/reference mode): tighter tolerance.
    out_f32 = jax.block_until_ready(
        reward_network_forward(state2, action2, params,
                               mxu_dtype=jnp.float32, block_batch=8))
    assert jnp.allclose(out_f32, ref2, atol=1e-4, rtol=1e-4), \
        "f32 mismatch vs JAX reference"

    print("KERNEL_OK")
</pallas_src>

<mosaic_0001>
module attributes {stable_mosaic.version = 11 : i64} {
  func.func @_reward_mlp_kernel(%arg0: i32, %arg1: memref<8x12xbf16, #tpu.memory_space<vmem>>, %arg2: memref<12x128xbf16, #tpu.memory_space<vmem>>, %arg3: memref<1x128xf32, #tpu.memory_space<vmem>>, %arg4: memref<128x64xbf16, #tpu.memory_space<vmem>>, %arg5: memref<1x64xf32, #tpu.memory_space<vmem>>, %arg6: memref<1x64xf32, #tpu.memory_space<vmem>>, %arg7: memref<1x1xf32, #tpu.memory_space<vmem>>, %arg8: memref<8x1xf32, #tpu.memory_space<vmem>>) attributes {dimension_semantics = [#tpu.dimension_semantics<parallel>], iteration_bounds = array<i64: 1>, scalar_prefetch = 0 : i64, scratch_operands = 0 : i64, tpu.core_type = #tpu.core_type<tc>, window_params = [{transform_indices = @transform_0, window_bounds = array<i64: 8, 12>}, {pipeline_mode = #tpu.pipeline_mode<synchronous>, transform_indices = @transform_1, window_bounds = array<i64: 12, 128>}, {pipeline_mode = #tpu.pipeline_mode<synchronous>, transform_indices = @transform_2, window_bounds = array<i64: 1, 128>}, {pipeline_mode = #tpu.pipeline_mode<synchronous>, transform_indices = @transform_3, window_bounds = array<i64: 128, 64>}, {pipeline_mode = #tpu.pipeline_mode<synchronous>, transform_indices = @transform_4, window_bounds = array<i64: 1, 64>}, {pipeline_mode = #tpu.pipeline_mode<synchronous>, transform_indices = @transform_5, window_bounds = array<i64: 1, 64>}, {pipeline_mode = #tpu.pipeline_mode<synchronous>, transform_indices = @transform_6, window_bounds = array<i64: 1, 1>}, {transform_indices = @transform_7, window_bounds = array<i64: 8, 1>}]} {
    %c0 = arith.constant 0 : index
    %c0_0 = arith.constant 0 : index
    %0 = vector.load %arg1[%c0, %c0_0] : memref<8x12xbf16, #tpu.memory_space<vmem>>, vector<8x12xbf16>
    %c0_1 = arith.constant 0 : index
    %c0_2 = arith.constant 0 : index
    %1 = vector.load %arg2[%c0_1, %c0_2] : memref<12x128xbf16, #tpu.memory_space<vmem>>, vector<12x128xbf16>
    %cst = arith.constant dense<0.000000e+00> : vector<8x128xf32>
    %2 = tpu.matmul %0, %1, %cst {dimension_numbers = #tpu.dot_dimension_numbers<[1], [0], [0], [1], [0, 0, 1, 1], [], []>} : vector<8x12xbf16>, vector<12x128xbf16>, vector<8x128xf32> -> vector<8x128xf32>
    %c0_3 = arith.constant 0 : index
    %c0_4 = arith.constant 0 : index
    %3 = vector.load %arg3[%c0_3, %c0_4] : memref<1x128xf32, #tpu.memory_space<vmem>>, vector<1x128xf32>
    %4 = vector.broadcast %3 : vector<1x128xf32> to vector<8x128xf32>
    %5 = arith.addf %2, %4 : vector<8x128xf32>
    %cst_5 = arith.constant 0.000000e+00 : f32
    %6 = vector.broadcast %cst_5 : f32 to vector<8x128xf32>
    %7 = arith.maximumf %5, %6 : vector<8x128xf32>
    %8 = arith.truncf %7 : vector<8x128xf32> to vector<8x128xbf16>
    %c0_6 = arith.constant 0 : index
    %c0_7 = arith.constant 0 : index
    %9 = vector.load %arg4[%c0_6, %c0_7] : memref<128x64xbf16, #tpu.memory_space<vmem>>, vector<128x64xbf16>
    %cst_8 = arith.constant dense<0.000000e+00> : vector<8x64xf32>
    %10 = tpu.matmul %8, %9, %cst_8 {dimension_numbers = #tpu.dot_dimension_numbers<[1], [0], [0], [1], [0, 0, 1, 1], [], []>} : vector<8x128xbf16>, vector<128x64xbf16>, vector<8x64xf32> -> vector<8x64xf32>
    %c0_9 = arith.constant 0 : index
    %c0_10 = arith.constant 0 : index
    %11 = vector.load %arg5[%c0_9, %c0_10] : memref<1x64xf32, #tpu.memory_space<vmem>>, vector<1x64xf32>
    %12 = vector.broadcast %11 : vector<1x64xf32> to vector<8x64xf32>
    %13 = arith.addf %10, %12 : vector<8x64xf32>
    %cst_11 = arith.constant 0.000000e+00 : f32
    %14 = vector.broadcast %cst_11 : f32 to vector<8x64xf32>
    %15 = arith.maximumf %13, %14 : vector<8x64xf32>
    %c0_12 = arith.constant 0 : index
    %c0_13 = arith.constant 0 : index
    %16 = vector.load %arg6[%c0_12, %c0_13] : memref<1x64xf32, #tpu.memory_space<vmem>>, vector<1x64xf32>
    %17 = vector.broadcast %16 : vector<1x64xf32> to vector<8x64xf32>
    %18 = arith.mulf %15, %17 : vector<8x64xf32>
    %cst_14 = arith.constant dense<0.000000e+00> : vector<8xf32>
    %19 = vector.multi_reduction <add>, %18, %cst_14 [1] : vector<8x64xf32> to vector<8xf32>
    %20 = vector.shape_cast %19 : vector<8xf32> to vector<8x1xf32>
    %c0_15 = arith.constant 0 : index
    %c0_16 = arith.constant 0 : index
    %21 = vector.load %arg7[%c0_15, %c0_16] : memref<1x1xf32, #tpu.memory_space<vmem>>, vector<1x1xf32>
    %22 = vector.broadcast %21 : vector<1x1xf32> to vector<8x1xf32>
    %23 = arith.addf %20, %22 : vector<8x1xf32>
    %c0_17 = arith.constant 0 : index
    %c0_18 = arith.constant 0 : index
    %24 = vector.load %arg8[%c0_17, %c0_18] : memref<8x1xf32, #tpu.memory_space<vmem>>, vector<8x1xf32>
    tpu.vector_store %arg8[%c0_17, %c0_18], %23 {strides = array<i32>} : memref<8x1xf32, #tpu.memory_space<vmem>>, vector<8x1xf32>,
    return
  }
  func.func @transform_0(%arg0: i32) -> (i32, i32) {
    %c0_i32 = arith.constant 0 : i32
    %c0_i32_0 = arith.constant 0 : i32
    return %arg0, %c0_i32 : i32, i32
  }
  func.func @transform_1(%arg0: i32) -> (i32, i32) {
    %c0_i32 = arith.constant 0 : i32
    %c0_i32_0 = arith.constant 0 : i32
    %c0_i32_1 = arith.constant 0 : i32
    return %c0_i32, %c0_i32_0 : i32, i32
  }
  func.func @transform_2(%arg0: i32) -> (i32, i32) {
    %c0_i32 = arith.constant 0 : i32
    %c0_i32_0 = arith.constant 0 : i32
    %c0_i32_1 = arith.constant 0 : i32
    return %c0_i32, %c0_i32_0 : i32, i32
  }
  func.func @transform_3(%arg0: i32) -> (i32, i32) {
    %c0_i32 = arith.constant 0 : i32
    %c0_i32_0 = arith.constant 0 : i32
    %c0_i32_1 = arith.constant 0 : i32
    return %c0_i32, %c0_i32_0 : i32, i32
  }
  func.func @transform_4(%arg0: i32) -> (i32, i32) {
    %c0_i32 = arith.constant 0 : i32
    %c0_i32_0 = arith.constant 0 : i32
    %c0_i32_1 = arith.constant 0 : i32
    return %c0_i32, %c0_i32_0 : i32, i32
  }
  func.func @transform_5(%arg0: i32) -> (i32, i32) {
    %c0_i32 = arith.constant 0 : i32
    %c0_i32_0 = arith.constant 0 : i32
    %c0_i32_1 = arith.constant 0 : i32
    return %c0_i32, %c0_i32_0 : i32, i32
  }
  func.func @transform_6(%arg0: i32) -> (i32, i32) {
    %c0_i32 = arith.constant 0 : i32
    %c0_i32_0 = arith.constant 0 : i32
    %c0_i32_1 = arith.constant 0 : i32
    return %c0_i32, %c0_i32_0 : i32, i32
  }
  func.func @transform_7(%arg0: i32) -> (i32, i32) {
    %c0_i32 = arith.constant 0 : i32
    %c0_i32_0 = arith.constant 0 : i32
    return %arg0, %c0_i32 : i32, i32
  }
}

</mosaic_0001>

<llo_original>
// kernel: reward_network_forward.1
$region0: #{reward_network_forward.1}
  #allocation0 [shape = 'u32[]', space=smem, size = 0x4, offset = 0x4, fixed_abs, tag = 'smem constant byte address 0x4 - core index']
  #allocation1 [shape = 'u32[144,128]{1,0:T(1,128)}', space=vmem, size = 0x12000, scoped, tag = 'internal scratch']
  #allocation2 [shape = 'f32[1,1]{1,0:T(1,128)S(1)}', space=vmem, size = 0x200, scoped, tag = 'scoped memory for reward_network_forward.1']
  %s0 = inlined_call_operand.vmem [shape: bf16[8,12], index: 0, kind: input, shape index: {}]
  %s1 = inlined_call_operand.vmem [shape: bf16[12,128], index: 1, kind: input, shape index: {}]
  %s2 = inlined_call_operand.vmem [shape: f32[1,128], index: 2, kind: input, shape index: {}]
  %s3 = inlined_call_operand.vmem [shape: bf16[128,64], index: 3, kind: input, shape index: {}]
  %s4 = inlined_call_operand.vmem [shape: f32[1,64], index: 4, kind: input, shape index: {}]
  %s5 = inlined_call_operand.vmem [shape: f32[1,64], index: 5, kind: input, shape index: {}]
  %s6 = inlined_call_operand.<no memory space> [shape: f32[1,1], index: 6, kind: input, shape index: {}]
  %s7 = inlined_call_operand.vmem [shape: f32[8,1], index: 7, kind: output, shape index: {}]
  %s8 = sld [smem:[#allocation0]]
  $region38: #{reward_network_forward.1} parent=0
    _
  %s10 = ssub.s32 1, %s8
  %s11 = scalar_select 0, %s10, %s8
  %v12 = vstv %s6
  %13 = vst [vmem:[#allocation2] sm:$0x1] %v12
  // Predicated region
  $region2: #{reward_network_forward.1} parent=0 // pred_check
    _
  $region3: #{reward_network_forward.1} parent=0 // pred_check_branch
    %15 = sbr.rel (0) target = $region5
  $region4: #{reward_network_forward.1} parent=0 // pred_region
    _
  $region5: #{reward_network_forward.1} parent=0 // pred_fallthru
    _
  // Predicated region
  $region6: #{reward_network_forward.1} parent=0 // pred_check
    _
  $region7: #{reward_network_forward.1} parent=0 // pred_check_branch
    %17 = sbr.rel (0) target = $region9
  $region8: #{reward_network_forward.1} parent=0 // pred_region
    _
  $region9: #{reward_network_forward.1} parent=0 // pred_fallthru
    _
  // Predicated region
  $region10: #{reward_network_forward.1} parent=0 // pred_check
    _
  $region11: #{reward_network_forward.1} parent=0 // pred_check_branch
    %19 = sbr.rel (0) target = $region13
  $region12: #{reward_network_forward.1} parent=0 // pred_region
    _
  $region13: #{reward_network_forward.1} parent=0 // pred_fallthru
    _
  // Predicated region
  $region14: #{reward_network_forward.1} parent=0 // pred_check
    _
  $region15: #{reward_network_forward.1} parent=0 // pred_check_branch
    %21 = sbr.rel (0) target = $region17
  $region16: #{reward_network_forward.1} parent=0 // pred_region
    _
  $region17: #{reward_network_forward.1} parent=0 // pred_fallthru
    _
  // Predicated region
  $region18: #{reward_network_forward.1} parent=0 // pred_check
    _
  $region19: #{reward_network_forward.1} parent=0 // pred_check_branch
    %23 = sbr.rel (0) target = $region21
  $region20: #{reward_network_forward.1} parent=0 // pred_region
    _
  $region21: #{reward_network_forward.1} parent=0 // pred_fallthru
    _
  // Predicated region
  $region22: #{reward_network_forward.1} parent=0 // pred_check
    _
  $region23: #{reward_network_forward.1} parent=0 // pred_check_branch
    %25 = sbr.rel (0) target = $region25
  $region24: #{reward_network_forward.1} parent=0 // pred_region
    _
  $region25: #{reward_network_forward.1} parent=0 // pred_fallthru
    _
  // Predicated region
  $region26: #{reward_network_forward.1} parent=0 // pred_check
    _
  $region27: #{reward_network_forward.1} parent=0 // pred_check_branch
    %27 = sbr.rel (0) target = $region29
  $region28: #{reward_network_forward.1} parent=0 // pred_region
    _
  $region29: #{reward_network_forward.1} parent=0 // pred_fallthru
    _
  %v29 = vld [vmem:[%s0] sm:$0xf]
  %v30 = vld [vmem:[%s1] sm:$0xf]
  %v31 = vld [vmem:[%s1 + $0x4] sm:$0x3]
  %v32 = vld [vmem:[%s2] sm:$0x1]
  %v34 = vlaneseq
  %v35 = vshrl.u32 %v34, 7
  %v36 = vsub.s32 0, %v35
  %v37 = vrot.slane %v32, %v36
  %v41 = vunpack.c.l.b16 %v30
  %v42 = vunpack.c.l.b16 %v31
  %v43 = vpack.c.b16 %v42, %v41
  %vm44 = vcmask 97280
  %v46 = vsel %vm44, %v29, 0
  %vm48 = vcmask 1045504
  %v50 = vsel %vm48, %v43, 0
  %52 = vmatprep.subr.bf16.mxu0 0
  %53 = vmatpush1.bf16.msra.mxu0 %v50
  %54 = vmatprep.subr.bf16.mxu0 0
  %55 = vmatpush1.bf16.msra.mxu0 0
  %56 = vmatprep.subr.bf16.mxu0 0
  %57 = vmatpush1.bf16.msra.mxu0 0
  %58 = vmatprep.subr.bf16.mxu0 0
  %59 = vmatpush1.bf16.msra.mxu0 0
  %60 = vmatprep.subr.bf16.mxu0 0
  %61 = vmatpush1.bf16.msra.mxu0 0
  %62 = vmatprep.subr.bf16.mxu0 0
  %63 = vmatpush1.bf16.msra.mxu0 0
  %64 = vmatprep.subr.bf16.mxu0 0
  %65 = vmatpush1.bf16.msra.mxu0 0
  %66 = vmatprep.subr.bf16.mxu0 0
  %67 = vmatpush1.bf16.msra.mxu0 0
  %68 = vmatprep.subr.bf16.mxu0 0
  %69 = vmatpush1.bf16.msra.mxu0 0
  %70 = vmatprep.subr.bf16.mxu0 0
  %71 = vmatpush1.bf16.msra.mxu0 0
  %72 = vmatprep.subr.bf16.mxu0 0
  %73 = vmatpush1.bf16.msra.mxu0 0
  %74 = vmatprep.subr.bf16.mxu0 0
  %75 = vmatpush1.bf16.msra.mxu0 0
  %76 = vmatprep.subr.bf16.mxu0 0
  %77 = vmatpush1.bf16.msra.mxu0 0
  %78 = vmatprep.subr.bf16.mxu0 0
  %79 = vmatpush1.bf16.msra.mxu0 0
  %80 = vmatprep.subr.bf16.mxu0 0
  %81 = vmatpush1.bf16.msra.mxu0 0
  %82 = vmatprep.subr.bf16.mxu0 0
  %83 = vmatpush1.bf16.msra.mxu0 0
  %84 = vmatprep.mubr.bf16.mxu0 0
  %85 = vmatmul.mubr.bf16.gmra.mrb[0].mxu0 %v46
  %v86 = vpop.f32.mrb[0].mxu0
  %v87 = vadd.f32 %v37, %v86
  %v88 = vpop.f32.mrb[0].mxu0
  %v89 = vpop.f32.mrb[0].mxu0
  %v90 = vpop.f32.mrb[0].mxu0
  %91 = vdwg.mxu0
  %v92 = vmax.f32 %v87, 0.0
  %v93 = vpack.c.bf16 %v92, %v92
  %v94 = vld [vmem:[%s3] sm:$0xf]
  %v95 = vld [vmem:[%s3 + $0x4] sm:$0xf]
  %v96 = vld [vmem:[%s3 + $0x8] sm:$0xf]
  %v97 = vld [vmem:[%s3 + $0xc] sm:$0xf]
  %v98 = vld [vmem:[%s3 + $0x10] sm:$0xf]
  %v99 = vld [vmem:[%s3 + $0x14] sm:$0xf]
  %v100 = vld [vmem:[%s3 + $0x18] sm:$0xf]
  %v101 = vld [vmem:[%s3 + $0x1c] sm:$0xf]
  %v102 = vld [vmem:[%s3 + $0x20] sm:$0xf]
  %v103 = vld [vmem:[%s3 + $0x24] sm:$0xf]
  %v104 = vld [vmem:[%s3 + $0x28] sm:$0xf]
  %v105 = vld [vmem:[%s3 + $0x2c] sm:$0xf]
  %v106 = vld [vmem:[%s3 + $0x30] sm:$0xf]
  %v107 = vld [vmem:[%s3 + $0x34] sm:$0xf]
  %v108 = vld [vmem:[%s3 + $0x38] sm:$0xf]
  %v109 = vld [vmem:[%s3 + $0x3c] sm:$0xf]
  %v110 = vld [vmem:[%s4] sm:$0x1]
  %v112 = vlaneseq
  %v113 = vshrl.u32 %v112, 7
  %v114 = vsub.s32 0, %v113
  %v115 = vrot.slane %v110, %v114
  %v133 = vunpack.c.l.b16 %v94
  %v134 = vunpack.c.l.b16 %v95
  %v135 = vunpack.c.l.b16 %v96
  %v136 = vunpack.c.l.b16 %v97
  %v137 = vunpack.c.l.b16 %v98
  %v138 = vunpack.c.l.b16 %v99
  %v139 = vunpack.c.l.b16 %v100
  %v140 = vunpack.c.l.b16 %v101
  %v141 = vunpack.c.l.b16 %v102
  %v142 = vunpack.c.l.b16 %v103
  %v143 = vunpack.c.l.b16 %v104
  %v144 = vunpack.c.l.b16 %v105
  %v145 = vunpack.c.l.b16 %v106
  %v146 = vunpack.c.l.b16 %v107
  %v147 = vunpack.c.l.b16 %v108
  %v148 = vunpack.c.l.b16 %v109
  %v149 = vpack.c.b16 %v134, %v133
  %v150 = vpack.c.b16 %v136, %v135
  %v151 = vpack.c.b16 %v138, %v137
  %v152 = vpack.c.b16 %v140, %v139
  %v153 = vpack.c.b16 %v142, %v141
  %v154 = vpack.c.b16 %v144, %v143
  %v155 = vpack.c.b16 %v146, %v145
  %v156 = vpack.c.b16 %v148, %v147
  %165 = vmatprep.subr.bf16.mxu0 0
  %166 = vmatpush1.bf16.msra.mxu0 %v149
  %167 = vmatprep.subr.bf16.mxu0 0
  %168 = vmatpush1.bf16.msra.mxu0 %v150
  %169 = vmatprep.subr.bf16.mxu0 0
  %170 = vmatpush1.bf16.msra.mxu0 %v151
  %171 = vmatprep.subr.bf16.mxu0 0
  %172 = vmatpush1.bf16.msra.mxu0 %v152
  %173 = vmatprep.subr.bf16.mxu0 0
  %174 = vmatpush1.bf16.msra.mxu0 %v153
  %175 = vmatprep.subr.bf16.mxu0 0
  %176 = vmatpush1.bf16.msra.mxu0 %v154
  %177 = vmatprep.subr.bf16.mxu0 0
  %178 = vmatpush1.bf16.msra.mxu0 %v155
  %179 = vmatprep.subr.bf16.mxu0 0
  %180 = vmatpush1.bf16.msra.mxu0 %v156
  %181 = vmatprep.subr.bf16.mxu0 0
  %182 = vmatpush1.bf16.msra.mxu0 0
  %183 = vmatprep.subr.bf16.mxu0 0
  %184 = vmatpush1.bf16.msra.mxu0 0
  %185 = vmatprep.subr.bf16.mxu0 0
  %186 = vmatpush1.bf16.msra.mxu0 0
  %187 = vmatprep.subr.bf16.mxu0 0
  %188 = vmatpush1.bf16.msra.mxu0 0
  %189 = vmatprep.subr.bf16.mxu0 0
  %190 = vmatpush1.bf16.msra.mxu0 0
  %191 = vmatprep.subr.bf16.mxu0 0
  %192 = vmatpush1.bf16.msra.mxu0 0
  %193 = vmatprep.subr.bf16.mxu0 0
  %194 = vmatpush1.bf16.msra.mxu0 0
  %195 = vmatprep.subr.bf16.mxu0 0
  %196 = vmatpush1.bf16.msra.mxu0 0
  %197 = vmatprep.mubr.bf16.mxu0 0
  %198 = vmatmul.mubr.bf16.gmra.mrb[0].mxu0 %v93
  %v199 = vpop.f32.mrb[0].mxu0
  %v200 = vadd.f32 %v115, %v199
  %v201 = vpop.f32.mrb[0].mxu0
  %v202 = vpop.f32.mrb[0].mxu0
  %v203 = vpop.f32.mrb[0].mxu0
  %204 = vdwg.mxu0
  %v205 = vmax.f32 %v200, 0.0
  %v206 = vld [vmem:[%s5] sm:$0x1]
  %v208 = vlaneseq
  %v209 = vshrl.u32 %v208, 7
  %v210 = vsub.s32 0, %v209
  %v211 = vrot.slane %v206, %v210
  %v213 = vmul.f32 %v205, %v211
  %vm214 = vcmask 523264
  %v215 = vsel %vm214, %v213, 0.0
  %216 = vadd.xlane.f32.xlu0 %v215
  %v217 = vpop.xlane.xlu0 %216
  %v218 = vld [vmem:[#allocation2] sm:$0x1]
  %v220 = vlaneseq
  %v221 = vshrl.u32 %v220, 7
  %v222 = vsub.s32 0, %v221
  %v223 = vrot.slane %v218, %v222
  %v225 = vadd.f32 %v217, %v223
  %vm226 = vcmask 7168
  %227 = vst.msk [vmem:[%s7] sm:$0xff] %vm226, %v225
  // Predicated region
  $region30: #{reward_network_forward.1} parent=0 // pred_check
    _
  $region31: #{reward_network_forward.1} parent=0 // pred_check_branch
    %229 = sbr.rel (0) target = $region33
  $region32: #{reward_network_forward.1} parent=0 // pred_region
    _
  $region33: #{reward_network_forward.1} parent=0 // pred_fallthru
    _
  // Predicated region
  $region34: #{reward_network_forward.1} parent=0 // pred_check
    _
  $region35: #{reward_network_forward.1} parent=0 // pred_check_branch
    %231 = sbr.rel (0) target = $region37
  $region36: #{reward_network_forward.1} parent=0 // pred_region
    _
  $region37: #{reward_network_forward.1} parent=0 // pred_fallthru
    _

</llo_original>
